<compile_context>
chip_gen: v5e
topology: v5e:2x2
jax: 0.10.0
libtpu: 0.0.40
codegen_flags: <defaults>
</compile_context>

<pallas_src>
import jax
import jax.numpy as jnp
from jax import lax
from jax.experimental import pallas as pl
from jax.experimental.pallas import tpu as pltpu


def _pair(v):
    return (v, v) if isinstance(v, int) else tuple(v)


def _pick_hw_tile(hw: int) -> int:
    """Largest lane-dense tile of the flattened spatial axis; keeps the
    double-buffered blocks comfortably inside v7x's 64 MiB VMEM."""
    if hw <= 8192:
        return hw
    for t in (8192, 4096, 2048, 1024, 512, 256, 128):
        if hw % t == 0:
            return t
    return hw  # fallback: one block (shapes in this demo are small)


def _convt_matmul_kernel(w_ref, b_ref, p_ref, o_ref):
    # w_ref : (C_out, KKC)      flipped/transposed weight, resident across grid
    # b_ref : (C_out, 1)        bias column (zeros if the module has no bias)
    # p_ref : (1, KKC, THW)     im2col patches for batch n, spatial tile t
    # o_ref : (1, C_out, THW)   lane-dense output slab
    acc = jnp.dot(w_ref[...], p_ref[0],
                  preferred_element_type=jnp.float32)   # single MXU matmul, f32 acc
    o_ref[0] = (acc + b_ref[...]).astype(o_ref.dtype)


def meta_conv_transpose2d(x, weight, bias=None, *, stride=1, padding=0,
                          output_padding=0, dilation=1, groups=1):
    """Equivalent of F.conv_transpose2d(x, weight, bias, stride, padding,
    output_padding, groups, dilation) for groups == 1."""
    # TODO(synk): groups > 1 (grouped transposed conv) not implemented.
    assert groups == 1, "only groups == 1 is supported"

    N, C_in, H, W = x.shape
    C_in_w, C_out, kH, kW = weight.shape
    assert C_in == C_in_w, "weight/input channel mismatch"
    sH, sW = _pair(stride)
    pH, pW = _pair(padding)
    opH, opW = _pair(output_padding)
    dH, dW = _pair(dilation)

    H_out = (H - 1) * sH - 2 * pH + dH * (kH - 1) + opH + 1
    W_out = (W - 1) * sW - 2 * pW + dW * (kW - 1) + opW + 1

    # ---- wrapper-side layout plumbing -------------------------------------
    # 1) zero-insert by stride (interior pad) + edge pad/crop so a stride-1
    #    VALID conv with the flipped kernel reproduces conv_transpose.
    lo_h, hi_h = dH * (kH - 1) - pH, dH * (kH - 1) - pH + opH
    lo_w, hi_w = dW * (kW - 1) - pW, dW * (kW - 1) - pW + opW
    x_d = lax.pad(x, jnp.array(0, dtype=x.dtype),
                  [(0, 0, 0), (0, 0, 0),
                   (lo_h, hi_h, sH - 1), (lo_w, hi_w, sW - 1)])
    # x_d : (N, C_in, H_out + dH*(kH-1), W_out + dW*(kW-1))

    # 2) flipped, channel-swapped weight as the matmul LHS:
    #    Wf[co, ci, kh, kw] = weight[ci, co, kH-1-kh, kW-1-kw]
    w_f = jnp.flip(weight, axis=(2, 3)).transpose(1, 0, 2, 3)        # (C_out,C_in,kH,kW)
    w_mat = w_f.transpose(0, 2, 3, 1).reshape(C_out, kH * kW * C_in)  # (C_out, KKC)

    # 3) im2col patches with (kh, kw, ci) minor order matching w_mat
    patches = []
    for kh in range(kH):
        for kw in range(kW):
            patches.append(lax.slice(
                x_d, (0, 0, kh * dH, kw * dW),
                (N, C_in, kh * dH + H_out, kw * dW + W_out)))
    HW = H_out * W_out
    KKC = kH * kW * C_in
    p = jnp.stack(patches, axis=1).reshape(N, KKC, HW)                # (N, KKC, HW)

    b_col = bias if bias is not None else jnp.zeros((C_out,), x.dtype)
    b_col = b_col.astype(jnp.float32).reshape(C_out, 1)

    # ---- single fused MXU matmul in Pallas --------------------------------
    tile_hw = _pick_hw_tile(HW)
    n_tiles = HW // tile_hw

    out_flat = pl.pallas_call(
        _convt_matmul_kernel,
        out_shape=jax.ShapeDtypeStruct((N, C_out, HW), x.dtype),
        grid_spec=pltpu.PrefetchScalarGridSpec(
            num_scalar_prefetch=0,
            grid=(N, n_tiles),
            in_specs=[
                pl.BlockSpec((C_out, KKC), lambda n, t: (0, 0)),        # weight (reused)
                pl.BlockSpec((C_out, 1), lambda n, t: (0, 0)),          # bias   (reused)
                pl.BlockSpec((1, KKC, tile_hw), lambda n, t: (n, 0, t)),  # patches
            ],
            out_specs=pl.BlockSpec((1, C_out, tile_hw), lambda n, t: (n, 0, t)),
        ),
        compiler_params=pltpu.CompilerParams(
            dimension_semantics=("parallel", "parallel"),
        ),
        cost_estimate=pl.CostEstimate(
            flops=2 * N * C_out * KKC * HW,
            transcendentals=0,
            bytes_accessed=int(x.dtype.itemsize) * (N * KKC * HW + C_out * KKC
                                                    + N * C_out * HW) + 4 * C_out,
        ),
    )(w_mat, b_col, p)

    return out_flat.reshape(N, C_out, H_out, W_out)


# ---- independent pure-JAX reference (direct scatter definition) -----------
def _conv_transpose2d_reference(x, weight, bias, stride, padding,
                                output_padding, dilation):
    N, C_in, H, W = x.shape
    _, C_out, kH, kW = weight.shape
    sH, sW = _pair(stride)
    pH, pW = _pair(padding)
    opH, opW = _pair(output_padding)
    dH, dW = _pair(dilation)
    H_out = (H - 1) * sH - 2 * pH + dH * (kH - 1) + opH + 1
    W_out = (W - 1) * sW - 2 * pW + dW * (kW - 1) + opW + 1
    H_full = (H - 1) * sH + dH * (kH - 1) + 1
    W_full = (W - 1) * sW + dW * (kW - 1) + 1
    full = jnp.zeros((N, C_out, H_full, W_full), jnp.float32)
    for kh in range(kH):
        for kw in range(kW):
            contrib = jnp.einsum('nchw,cd->ndhw', x, weight[:, :, kh, kw])
            full = full.at[:, :,
                           kh * dH: kh * dH + (H - 1) * sH + 1: sH,
                           kw * dW: kw * dW + (W - 1) * sW + 1: sW].add(contrib)
    full = jnp.pad(full, ((0, 0), (0, 0), (0, opH), (0, opW)))
    y = full[:, :, pH:pH + H_out, pW:pW + W_out]
    if bias is not None:
        y = y + bias[None, :, None, None]
    return y


if __name__ == "__main__":
    # Small decoder-style config: ConvTranspose2d(4, 8, kernel_size=4, stride=2, padding=1)
    N, C_in, C_out = 2, 4, 8
    H = W = 8
    kH = kW = 4
    stride, padding, output_padding, dilation = (2, 2), (1, 1), (0, 0), (1, 1)

    key = jax.random.PRNGKey(0)
    kx, kwt, kb = jax.random.split(key, 3)
    x = jax.random.normal(kx, (N, C_in, H, W), jnp.float32)
    weight = jax.random.normal(kwt, (C_in, C_out, kH, kW), jnp.float32) * 0.1
    bias = jax.random.normal(kb, (C_out,), jnp.float32) * 0.1

    out = meta_conv_transpose2d(x, weight, bias, stride=stride, padding=padding,
                                output_padding=output_padding, dilation=dilation)
    out = jax.block_until_ready(out)

    ref = _conv_transpose2d_reference(x, weight, bias, stride, padding,
                                      output_padding, dilation)

    assert out.shape == (N, C_out, 16, 16), out.shape
    assert ref.shape == out.shape, (ref.shape, out.shape)
    assert jnp.allclose(out, ref, atol=1e-2, rtol=1e-2), (
        float(jnp.max(jnp.abs(out - ref)))
    )
    print("KERNEL_OK")
</pallas_src>

<mosaic_0001>
module attributes {stable_mosaic.version = 11 : i64} {
  func.func @_convt_matmul_kernel(%arg0: i32, %arg1: i32, %arg2: memref<8x64xf32, #tpu.memory_space<vmem>>, %arg3: memref<8x1xf32, #tpu.memory_space<vmem>>, %arg4: memref<1x64x256xf32, #tpu.memory_space<vmem>>, %arg5: memref<1x8x256xf32, #tpu.memory_space<vmem>>) attributes {dimension_semantics = [#tpu.dimension_semantics<parallel>, #tpu.dimension_semantics<parallel>], iteration_bounds = array<i64: 2, 1>, scalar_prefetch = 0 : i64, scratch_operands = 0 : i64, tpu.core_type = #tpu.core_type<tc>, window_params = [{pipeline_mode = #tpu.pipeline_mode<synchronous>, transform_indices = @transform_0, window_bounds = array<i64: 8, 64>}, {pipeline_mode = #tpu.pipeline_mode<synchronous>, transform_indices = @transform_1, window_bounds = array<i64: 8, 1>}, {transform_indices = @transform_2, window_bounds = array<i64: 1, 64, 256>}, {transform_indices = @transform_3, window_bounds = array<i64: 1, 8, 256>}]} {
    %c0 = arith.constant 0 : index
    %c0_0 = arith.constant 0 : index
    %0 = vector.load %arg2[%c0, %c0_0] : memref<8x64xf32, #tpu.memory_space<vmem>>, vector<8x64xf32>
    %c0_1 = arith.constant 0 : index
    %c0_2 = arith.constant 0 : index
    %c0_3 = arith.constant 0 : index
    %1 = vector.load %arg4[%c0_1, %c0_2, %c0_3] : memref<1x64x256xf32, #tpu.memory_space<vmem>>, vector<1x64x256xf32>
    %2 = vector.shape_cast %1 : vector<1x64x256xf32> to vector<64x256xf32>
    %cst = arith.constant dense<0.000000e+00> : vector<8x256xf32>
    %3 = tpu.matmul %0, %2, %cst {dimension_numbers = #tpu.dot_dimension_numbers<[1], [0], [0], [1], [0, 0, 1, 1], [], []>} : vector<8x64xf32>, vector<64x256xf32>, vector<8x256xf32> -> vector<8x256xf32>
    %c0_4 = arith.constant 0 : index
    %c0_5 = arith.constant 0 : index
    %4 = vector.load %arg3[%c0_4, %c0_5] : memref<8x1xf32, #tpu.memory_space<vmem>>, vector<8x1xf32>
    %5 = vector.broadcast %4 : vector<8x1xf32> to vector<8x256xf32>
    %6 = arith.addf %3, %5 : vector<8x256xf32>
    %c0_6 = arith.constant 0 : index
    %c0_7 = arith.constant 0 : index
    %c0_8 = arith.constant 0 : index
    %7 = vector.load %arg5[%c0_6, %c0_7, %c0_8] : memref<1x8x256xf32, #tpu.memory_space<vmem>>, vector<1x8x256xf32>
    %8 = vector.shape_cast %7 : vector<1x8x256xf32> to vector<8x256xf32>
    %9 = vector.shape_cast %6 : vector<8x256xf32> to vector<1x8x256xf32>
    tpu.vector_store %arg5[%c0_6, %c0_7, %c0_8], %9 {strides = array<i32>} : memref<1x8x256xf32, #tpu.memory_space<vmem>>, vector<1x8x256xf32>,
    return
  }
  func.func @transform_0(%arg0: i32, %arg1: i32) -> (i32, i32) {
    %c0_i32 = arith.constant 0 : i32
    %c0_i32_0 = arith.constant 0 : i32
    %c0_i32_1 = arith.constant 0 : i32
    return %c0_i32, %c0_i32_0 : i32, i32
  }
  func.func @transform_1(%arg0: i32, %arg1: i32) -> (i32, i32) {
    %c0_i32 = arith.constant 0 : i32
    %c0_i32_0 = arith.constant 0 : i32
    %c0_i32_1 = arith.constant 0 : i32
    return %c0_i32, %c0_i32_0 : i32, i32
  }
  func.func @transform_2(%arg0: i32, %arg1: i32) -> (i32, i32, i32) {
    %c0_i32 = arith.constant 0 : i32
    %c0_i32_0 = arith.constant 0 : i32
    return %arg0, %c0_i32, %arg1 : i32, i32, i32
  }
  func.func @transform_3(%arg0: i32, %arg1: i32) -> (i32, i32, i32) {
    %c0_i32 = arith.constant 0 : i32
    %c0_i32_0 = arith.constant 0 : i32
    return %arg0, %c0_i32, %arg1 : i32, i32, i32
  }
}

</mosaic_0001>

<llo_original>
// kernel: tpu_custom_call.1
$region0: #{tpu_custom_call.1}
  #allocation0 [shape = 'u32[]', space=smem, size = 0x4, offset = 0x4, fixed_abs, tag = 'smem constant byte address 0x4 - core index']
  #allocation1 [shape = 'u32[72,128]{1,0:T(1,128)}', space=vmem, size = 0x9000, scoped, tag = 'internal scratch']
  %s0 = inlined_call_operand.vmem [shape: f32[8,64], index: 0, kind: input, shape index: {}]
  %s1 = inlined_call_operand.vmem [shape: f32[8,1], index: 1, kind: input, shape index: {}]
  %s2 = inlined_call_operand.hbm [shape: f32[2,64,256], index: 2, kind: input, shape index: {}]
  %s3 = inlined_call_operand.hbm [shape: f32[2,8,256], index: 3, kind: output, shape index: {}]
  %s4 = sld [smem:[#allocation0]]
  $region49: #{tpu_custom_call.1} parent=0
    _
  %s6 = ssub.s32 1, %s4
  %s7 = scalar_select 0, %s6, %s4
  $region1: #{tpu_custom_call.1} parent=0
    #allocation2 [shape = 'u8[131072]{0}', space=vmem, size = 0x20000, scoped, tag = 'input window, operand 2']
    #allocation3 [shape = 's32[2]{0}', space=sflag, size = 0x8, scoped, tag = 'scoped memory for tpu_custom_call.1']
    #allocation4 [shape = 's32[2]{0}', space=sflag, size = 0x8, scoped, tag = 'scoped memory for tpu_custom_call.1']
    #allocation5 [shape = 'u8[16384]{0}', space=vmem, size = 0x4000, scoped, tag = 'output window, operand 0']
    %8 = vsyncpa [#allocation3], 0
    %s9 = scalar_lea.sflag [#allocation3], 1
    %10 = vsyncpa %s9, 0
    %11 = vsyncpa [#allocation4], 0
    %s12 = scalar_lea.sflag [#allocation4], 1
    %13 = vsyncpa %s12, 0
    loop: start=0, step=1, limit=4
    $region2: #{tpu_custom_call.1} parent=1 // loop_pre_header
      _
    $region3: #{tpu_custom_call.1} parent=1 // loop_header
      %s15 = sphi 0, %s19
      %p16 = scmp.ge.s32.totalorder %s15, 4
      %s22 = sphi 0, %s34
      %s23 = sphi 0, %s30
      %s24 = sphi 0, %s22
      %s25 = sphi 0, %s23
      %s26 = sphi 0, %s24
      %s27 = sphi 0, %s25
      %s35 = sphi 0, %s35
      %s37 = sphi 0, %s35
      %s38 = sphi 0, %s37
      %s52 = sphi 0, %s38
      %s56 = sphi 0, %s56
      %s58 = sphi 0, %s56
      %s59 = sphi 0, %s58
      %s73 = sphi 0, %s59
      %s81 = sphi 0, %s83
      %s84 = sphi 0, %s81
      %s85 = sphi 0, %s84
      %s101 = sphi 0, %s85
      %s109 = sphi 0, %s111
      %s112 = sphi 0, %s109
      %s113 = sphi 0, %s112
      %s129 = sphi 0, %s113
    $region4: #{tpu_custom_call.1} parent=1 // loop_header_branch
      %18 = sbr.rel (%p16) target = $region8
    $region5: #{tpu_custom_call.1} parent=1 // loop_body
      %s20 = ssub.s32 %s15, 1
      %s21 = ssub.s32 %s15, 2
      %s28 = sadd.s32 1, %s23
      %p29 = scmp.ge.s32.totalorder %s28, 1
      %s30 = scalar_select %p29, 0, %s28
      %s31 = sadd.s32 1, %s22
      %s32 = scalar_select %p29, %s31, %s22
      %p33 = scmp.ge.s32.totalorder %s32, 2
      %s34 = scalar_select %p33, 0, %s32
      %s36 = sadd.s32 %s35, 1
      %p39 = scmp.eq.s32.totalorder %s15, 1
      %p40 = scmp.ne.s32.totalorder %s35, %s37
      %p41 = scmp.eq.s32.totalorder %s15, 0
      %p42 = por %p40, %p41
      %p43 = scmp.ne.s32.totalorder %s35, %s37
      %p44 = scmp.eq.s32.totalorder %s20, 1
      %p45 = por %p43, %p44
      %p46 = scmp.ne.s32.totalorder %s37, %s38
      %p47 = scmp.eq.s32.totalorder %s20, 0
      %p48 = por %p46, %p47
      %p49 = scmp.ne.s32.totalorder %s37, %s38
      %p50 = scmp.eq.s32.totalorder %s21, 1
      %p51 = por %p49, %p50
      %p53 = scmp.ne.s32.totalorder %s38, %s52
      %p54 = scmp.eq.s32.totalorder %s21, 0
      %p55 = por %p53, %p54
      %s57 = sadd.s32 %s56, 1
      %p60 = scmp.eq.s32.totalorder %s15, 1
      %p61 = scmp.ne.s32.totalorder %s56, %s58
      %p62 = scmp.eq.s32.totalorder %s15, 0
      %p63 = por %p61, %p62
      %p64 = scmp.ne.s32.totalorder %s56, %s58
      %p65 = scmp.eq.s32.totalorder %s20, 1
      %p66 = por %p64, %p65
      %p67 = scmp.ne.s32.totalorder %s58, %s59
      %p68 = scmp.eq.s32.totalorder %s20, 0
      %p69 = por %p67, %p68
      %p70 = scmp.ne.s32.totalorder %s58, %s59
      %p71 = scmp.eq.s32.totalorder %s21, 1
      %p72 = por %p70, %p71
      %p74 = scmp.ne.s32.totalorder %s59, %s73
      %p75 = scmp.eq.s32.totalorder %s21, 0
      %p76 = por %p74, %p75
      %s77 = ssub.s32 %s22, %s34
      %s78 = ssub.s32 %s23, %s30
      %s79 = sor.u32 %s77, %s78
      %p80 = scmp.eq.s32.totalorder %s79, 0
      %s82 = sadd.s32 %s81, 1
      %s83 = scalar_select %p80, %s81, %s82
      %p86 = pneg %p80
      %p87 = scmp.eq.s32.totalorder %s15, 1
      %p88 = por %p86, %p87
      %p89 = scmp.ne.s32.totalorder %s81, %s84
      %p90 = scmp.eq.s32.totalorder %s15, 0
      %p91 = por %p89, %p90
      %p92 = scmp.ne.s32.totalorder %s81, %s84
      %p93 = scmp.eq.s32.totalorder %s20, 1
      %p94 = por %p92, %p93
      %p95 = scmp.ne.s32.totalorder %s84, %s85
      %p96 = scmp.eq.s32.totalorder %s20, 0
      %p97 = por %p95, %p96
      %p98 = scmp.ne.s32.totalorder %s84, %s85
      %p99 = scmp.eq.s32.totalorder %s21, 1
      %p100 = por %p98, %p99
      %p102 = scmp.ne.s32.totalorder %s85, %s101
      %p103 = scmp.eq.s32.totalorder %s21, 0
      %p104 = por %p102, %p103
      %s105 = ssub.s32 %s22, %s34
      %s106 = ssub.s32 %s23, %s30
      %s107 = sor.u32 %s105, %s106
      %p108 = scmp.eq.s32.totalorder %s107, 0
      %s110 = sadd.s32 %s109, 1
      %s111 = scalar_select %p108, %s109, %s110
      %p114 = pneg %p108
      %p115 = scmp.eq.s32.totalorder %s15, 1
      %p116 = por %p114, %p115
      %p117 = scmp.ne.s32.totalorder %s109, %s112
      %p118 = scmp.eq.s32.totalorder %s15, 0
      %p119 = por %p117, %p118
      %p120 = scmp.ne.s32.totalorder %s109, %s112
      %p121 = scmp.eq.s32.totalorder %s20, 1
      %p122 = por %p120, %p121
      %p123 = scmp.ne.s32.totalorder %s112, %s113
      %p124 = scmp.eq.s32.totalorder %s20, 0
      %p125 = por %p123, %p124
      %p126 = scmp.ne.s32.totalorder %s112, %s113
      %p127 = scmp.eq.s32.totalorder %s21, 1
      %p128 = por %p126, %p127
      %p130 = scmp.ne.s32.totalorder %s113, %s129
      %p131 = scmp.eq.s32.totalorder %s21, 0
      %p132 = por %p130, %p131
      %p133 = scmp.le.s32.totalorder 1, %s15
      %p134 = scmp.lt.s32.totalorder %s15, 3
      %p135 = pnand %p133, %p134
      %p136 = pneg %p135
      // Predicated region
      $region9: #{tpu_custom_call.1} parent=5 // pred_check
        _
      $region10: #{tpu_custom_call.1} parent=5 // pred_check_branch
        %138 = sbr.rel (%p135) target = $region12
      $region11: #{tpu_custom_call.1} parent=5 // pred_region
        %s139 = ssub.s32 %s15, 1
        // Predicated region
        $region13: #{tpu_custom_call.1} parent=11 // pred_check
          %p140 = pneg %p48
        $region14: #{tpu_custom_call.1} parent=11 // pred_check_branch
          %142 = sbr.rel (%p140) target = $region16
        $region15: #{tpu_custom_call.1} parent=11 // pred_region
          _
        $region16: #{tpu_custom_call.1} parent=11 // pred_fallthru
          _
        // Predicated region
        $region17: #{tpu_custom_call.1} parent=11 // pred_check
          %p143 = pneg %p69
        $region18: #{tpu_custom_call.1} parent=11 // pred_check_branch
          %145 = sbr.rel (%p143) target = $region20
        $region19: #{tpu_custom_call.1} parent=11 // pred_region
          _
        $region20: #{tpu_custom_call.1} parent=11 // pred_fallthru
          _
      $region12: #{tpu_custom_call.1} parent=5 // pred_fallthru
        _
      %p146 = scmp.lt.s32.totalorder %s15, 2
      // Predicated region
      $region21: #{tpu_custom_call.1} parent=5 // pred_check
        %p147 = pneg %p146
      $region22: #{tpu_custom_call.1} parent=5 // pred_check_branch
        %149 = sbr.rel (%p147) target = $region24
      $region23: #{tpu_custom_call.1} parent=5 // pred_region
        // Predicated region
        $region25: #{tpu_custom_call.1} parent=23 // pred_check
          %p150 = pneg %p91
        $region26: #{tpu_custom_call.1} parent=23 // pred_check_branch
          %152 = sbr.rel (%p150) target = $region28
        $region27: #{tpu_custom_call.1} parent=23 // pred_region
          %s153 = sand.u32 %s81, 1
          %s154 = scalar_lea.sflag [#allocation3], %s153
          %s155 = sand.u32 %s81, 1
          %s156 = smul.addr %s155, 128
          %s157 = scalar_lea.vmem [#allocation2], %s156
          %s158 = smul.u32 2, %s23
          %160 = vsyncadd %s154, 0
          %s161 = smul.addr %s22, 16
          %s162 = sadd.s32 %s158, %s161
          %s163 = smul.addr %s162, 8
          %s164 = scalar_lea.hbm %s2, %s163
          %s165 = sshll.u32 %s164, 4
          %s166 = int_to_ptr.hbm [resolvable:$true] %s165
          %s167 = sshll.u32 %s157, 4
          %s168 = int_to_ptr.vmem [resolvable:$true] %s167
          %173 = dma.hbm_to_vmem [thread:$0]  %s166, 2048, %s168, %s154, 256, 256, 16
        $region28: #{tpu_custom_call.1} parent=23 // pred_fallthru
          _
      $region24: #{tpu_custom_call.1} parent=5 // pred_fallthru
        _
      %p174 = scmp.le.s32.totalorder 1, %s15
      %p175 = scmp.lt.s32.totalorder %s15, 3
      %p176 = pnand %p174, %p175
      %p177 = pneg %p176
      // Predicated region
      $region29: #{tpu_custom_call.1} parent=5 // pred_check
        _
      $region30: #{tpu_custom_call.1} parent=5 // pred_check_branch
        %179 = sbr.rel (%p176) target = $region32
      $region31: #{tpu_custom_call.1} parent=5 // pred_region
        %s180 = ssub.s32 %s15, 1
        %s181 = sand.u32 %s84, 1
        %s182 = scalar_lea.sflag [#allocation3], %s181
        %s183 = sand.u32 %s84, 1
        %s184 = smul.addr %s183, 128
        %s185 = scalar_lea.vmem [#allocation2], %s184
        // Predicated region
        $region33: #{tpu_custom_call.1} parent=31 // pred_check
          %p186 = pneg %p97
        $region34: #{tpu_custom_call.1} parent=31 // pred_check_branch
          %188 = sbr.rel (%p186) target = $region36
        $region35: #{tpu_custom_call.1} parent=31 // pred_region
          %190 = dma.done %s182, 2048
        $region36: #{tpu_custom_call.1} parent=31 // pred_fallthru
          _
        %p191 = pneg %p48
        %p192 = pneg %p45
        %p193 = pneg %p69
        %p194 = pneg %p66
        %s195 = sand.u32 %s84, 1
        %s196 = scalar_lea.sflag [#allocation3], %s195
        %s197 = sand.u32 %s84, 1
        %s198 = smul.addr %s197, 128
        %s199 = scalar_lea.vmem [#allocation2], %s198
        %p200 = pneg %p97
        %p201 = pneg %p94
        %p202 = pneg %p125
        %p203 = pneg %p122
        %s204 = sand.u32 %s112, 1
        %s205 = scalar_lea.sflag [#allocation4], %s204
        %s206 = sand.u32 %s112, 1
        %s207 = smul.addr %s206, 16
        %s208 = scalar_lea.vmem [#allocation5], %s207
        %s209 = smul.u32 2, %s25
        %s210 = smul.u32 2, %s25
        %v211 = vld [vmem:[%s0] sm:$0xff]
        %v212 = vld [vmem:[%s185] sm:$0xff]
        %v213 = vld [vmem:[%s185 + $0x8] sm:$0xff]
        %v214 = vld [vmem:[%s185 + $0x10] sm:$0xff]
        %v215 = vld [vmem:[%s185 + $0x18] sm:$0xff]
        %v216 = vld [vmem:[%s185 + $0x20] sm:$0xff]
        %v217 = vld [vmem:[%s185 + $0x28] sm:$0xff]
        %v218 = vld [vmem:[%s185 + $0x30] sm:$0xff]
        %v219 = vld [vmem:[%s185 + $0x38] sm:$0xff]
        %v220 = vld [vmem:[%s185 + $0x40] sm:$0xff]
        %v221 = vld [vmem:[%s185 + $0x48] sm:$0xff]
        %v222 = vld [vmem:[%s185 + $0x50] sm:$0xff]
        %v223 = vld [vmem:[%s185 + $0x58] sm:$0xff]
        %v224 = vld [vmem:[%s185 + $0x60] sm:$0xff]
        %v225 = vld [vmem:[%s185 + $0x68] sm:$0xff]
        %v226 = vld [vmem:[%s185 + $0x70] sm:$0xff]
        %v227 = vld [vmem:[%s185 + $0x78] sm:$0xff]
        %v228 = vld [vmem:[%s1] sm:$0xff]
        %230 = vset.pattern.permute.xlu0 0
        %231 = vperm.xlu0 %230, %v228
        %v232 = vpop.permute.xlu0 %231
        %vm234 = vcmask 523264
        %v236 = vsel %vm234, %v211, 0
        %238 = vmatpush.msra.mxu0 0.0
        %239 = vmatpush.msra.mxu0 0.0
        %240 = vmatpush.msra.mxu0 0.0
        %241 = vmatpush.msra.mxu0 0.0
        %242 = vmatpush.msra.mxu0 0.0
        %243 = vmatpush.msra.mxu0 0.0
        %244 = vmatpush.msra.mxu0 0.0
        %245 = vmatpush.msra.mxu0 0.0
        %246 = vmatpush.msra.mxu0 %v226
        %247 = vmatpush.msra.mxu0 %v224
        %248 = vmatpush.msra.mxu0 %v222
        %249 = vmatpush.msra.mxu0 %v220
        %250 = vmatpush.msra.mxu0 %v218
        %251 = vmatpush.msra.mxu0 %v216
        %252 = vmatpush.msra.mxu0 %v214
        %253 = vmatpush.msra.mxu0 %v212
        %254 = vmatmul.f32.gmra.mxu0 %v236
        %v255 = vpop.f32.mrf.mxu0
        %v256 = vadd.f32 %v232, %v255
        %257 = vdwg.mxu0
        %258 = vmatpush.msra.mxu0 0.0
        %259 = vmatpush.msra.mxu0 0.0
        %260 = vmatpush.msra.mxu0 0.0
        %261 = vmatpush.msra.mxu0 0.0
        %262 = vmatpush.msra.mxu0 0.0
        %263 = vmatpush.msra.mxu0 0.0
        %264 = vmatpush.msra.mxu0 0.0
        %265 = vmatpush.msra.mxu0 0.0
        %266 = vmatpush.msra.mxu0 %v227
        %267 = vmatpush.msra.mxu0 %v225
        %268 = vmatpush.msra.mxu0 %v223
        %269 = vmatpush.msra.mxu0 %v221
        %270 = vmatpush.msra.mxu0 %v219
        %271 = vmatpush.msra.mxu0 %v217
        %272 = vmatpush.msra.mxu0 %v215
        %273 = vmatpush.msra.mxu0 %v213
        %274 = vmatmul.f32.gmra.mxu0 %v236
        %v275 = vpop.f32.mrf.mxu0
        %v276 = vadd.f32 %v232, %v275
        %277 = vdwg.mxu0
        %278 = vst [vmem:[%s208] sm:$0xff] %v256
        %279 = vst [vmem:[%s208 + $0x8] sm:$0xff] %v276
        %s280 = sand.u32 %s112, 1
        %s281 = scalar_lea.sflag [#allocation4], %s280
        %s282 = sand.u32 %s112, 1
        %s283 = smul.addr %s282, 16
        %s284 = scalar_lea.vmem [#allocation5], %s283
        // Predicated region
        $region37: #{tpu_custom_call.1} parent=31 // pred_check
          %p285 = pneg %p122
        $region38: #{tpu_custom_call.1} parent=31 // pred_check_branch
          %287 = sbr.rel (%p285) target = $region40
        $region39: #{tpu_custom_call.1} parent=31 // pred_region
          %s288 = smul.u32 2, %s25
          %290 = vsyncadd %s281, 0
          %s291 = smul.addr %s24, 2
          %s292 = sadd.s32 %s288, %s291
          %s293 = smul.addr %s292, 8
          %s294 = scalar_lea.hbm %s3, %s293
          %s296 = sshll.u32 %s284, 4
          %s297 = int_to_ptr.vmem [resolvable:$true] %s296
          %s298 = sshll.u32 %s294, 4
          %s299 = int_to_ptr.hbm [resolvable:$true] %s298
          %301 = dma.vmem_to_hbm [thread:$0]  %s297, 256, %s299, %s281
        $region40: #{tpu_custom_call.1} parent=31 // pred_fallthru
          _
      $region32: #{tpu_custom_call.1} parent=5 // pred_fallthru
        _
      %p302 = scmp.le.s32.totalorder 2, %s15
      // Predicated region
      $region41: #{tpu_custom_call.1} parent=5 // pred_check
        %p303 = pneg %p302
      $region42: #{tpu_custom_call.1} parent=5 // pred_check_branch
        %305 = sbr.rel (%p303) target = $region44
      $region43: #{tpu_custom_call.1} parent=5 // pred_region
        %s306 = ssub.s32 %s15, 2
        // Predicated region
        $region45: #{tpu_custom_call.1} parent=43 // pred_check
          %p307 = pneg %p128
        $region46: #{tpu_custom_call.1} parent=43 // pred_check_branch
          %309 = sbr.rel (%p307) target = $region48
        $region47: #{tpu_custom_call.1} parent=43 // pred_region
          %s310 = sand.u32 %s113, 1
          %s311 = scalar_lea.sflag [#allocation4], %s310
          %s312 = sand.u32 %s113, 1
          %s313 = smul.addr %s312, 16
          %s314 = scalar_lea.vmem [#allocation5], %s313
          %316 = dma.done %s311, 256
        $region48: #{tpu_custom_call.1} parent=43 // pred_fallthru
          _
      $region44: #{tpu_custom_call.1} parent=5 // pred_fallthru
        _
    $region6: #{tpu_custom_call.1} parent=1 // loop_footer
      %s19 = sadd.s32 1, %s15
    $region7: #{tpu_custom_call.1} parent=1 // loop_footer_branch
      %14 = sbr.rel target = $region3
    $region8: #{tpu_custom_call.1} parent=1 // loop_exit
      _
    %317 = vsyncpa [#allocation3], 1
    %s318 = scalar_lea.sflag [#allocation3], 1
    %319 = vsyncpa %s318, 1
    %320 = vsyncpa [#allocation4], 1
    %s321 = scalar_lea.sflag [#allocation4], 1
    %322 = vsyncpa %s321, 1

</llo_original>
